<compile_context>
chip_gen: v6e
topology: v6e:2x2x1
jax: 0.10.0
libtpu: 0.0.40
codegen_flags: <defaults>
</compile_context>

<pallas_src>
import functools

import jax
import jax.numpy as jnp
from jax.experimental import pallas as pl
from jax.experimental.pallas import tpu as pltpu


def _elu(x):
    return jnp.where(x > 0.0, x, jnp.exp(x) - 1.0)


def _round_up(v, m):
    return ((v + m - 1) // m) * m


def _tpu_generation():
    try:
        kind = jax.devices()[0].device_kind.lower()
    except Exception:
        return 0
    for g in (7, 6, 5, 4, 3):
        if (f"v{g}" in kind) or (f"{g}e" in kind) or (f"{g}p" in kind) or (f"{g}x" in kind):
            return g
    return 0


def _choose_tiles(n, gen):
    # TN (source block) is a power-of-two multiple of 128 so the int8 adj /
    # alpha_src^T lane dims stay tiling-legal; TM | TN so one padded N works for
    # both grid axes; aim for >=2 row blocks so v7x's two TensorCores get work.
    np128 = _round_up(max(n, 1), 128)
    tn_target = 512 if gen >= 6 else 256
    tn = 128
    while tn * 2 <= min(tn_target, np128):
        tn *= 2
    tm = min(128 if gen >= 7 else 256, tn)
    np_ = _round_up(n, tn)
    while tm > 32 and np_ // tm < 2:
        tm //= 2
    return tm, tn


def _build_w_aug(w, a_src, a_dst):
    # Columns: [per-head (W_h | zeros-col) ...] + [W_h @ a_dst_h] + [W_h @ a_src_h],
    # plus a final row mapping the appended ones-feature of x onto the per-head
    # "ones" columns.  One matmul then yields hx (+denominator helper column),
    # alpha_dst and alpha_src.
    fin, hc = w.shape
    h, c = a_src.shape
    assert hc == h * c
    w3 = w.reshape(fin, h, c)
    feat = jnp.concatenate([w3, jnp.zeros((fin, h, 1), w.dtype)],
                           axis=2).reshape(fin, h * (c + 1))
    adst_cols = jnp.einsum("fhc,hc->fh", w3, a_dst)
    asrc_cols = jnp.einsum("fhc,hc->fh", w3, a_src)
    top = jnp.concatenate([feat, adst_cols, asrc_cols], axis=1)
    ones_row = jnp.zeros((1, top.shape[1]), w.dtype)
    ones_row = ones_row.at[0, jnp.arange(h) * (c + 1) + c].set(1.0)
    return jnp.concatenate([top, ones_row], axis=0)        # [Fin+1, H*(C+1)+2H]


# ---------------------------------------------------------------------------
# Kernel 1: row-tiled fused projection (hx+ones-col, alpha_dst, alpha_src).
# ---------------------------------------------------------------------------
def _gat_project_kernel(x_ref, w_ref, hxa_ref, adst_ref, asrc_ref,
                        *, input_elu, width_hxa, heads):
    x = x_ref[...]                                           # [TM, Fin+1] bf16
    if input_elu:
        x = _elu(x.astype(jnp.float32)).astype(jnp.bfloat16)  # ELU(1)=1 keeps ones col
    proj = jnp.dot(x, w_ref[...], preferred_element_type=jnp.float32)
    hxa_ref[...] = proj[:, :width_hxa].astype(jnp.bfloat16)             # [TM, H*(C+1)]
    adst_ref[...] = proj[:, width_hxa:width_hxa + heads]                # [TM, H]
    asrc_ref[...] = proj[:, width_hxa + heads:width_hxa + 2 * heads]    # [TM, H]


# ---------------------------------------------------------------------------
# Kernel 2: online-softmax attention + aggregation (+ bias, + log_softmax).
# ---------------------------------------------------------------------------
def _gat_attn_kernel(adst_ref, asrcT_ref, hxa_ref, adj_ref, bias_ref, out_ref,
                     m_scr, acc_scr, *, heads, out_ch, e_dtype, output_log_softmax):
    j = pl.program_id(1)
    cp1 = out_ch + 1

    @pl.when(j == 0)
    def _init():
        m_scr[...] = jnp.full_like(m_scr, -1e30)   # finite -> self-healing, no NaN
        acc_scr[...] = jnp.zeros_like(acc_scr)

    # Additive edge mask built once per (row, src) block for all heads,
    # directly in the elementwise dtype (no f32 temp).
    zero = jnp.array(0.0, dtype=e_dtype)
    neg = jnp.array(-1e30, dtype=e_dtype)
    mask_bias = jnp.where(adj_ref[...] > 0, zero, neg)       # [TM, TN]

    adst = adst_ref[...].astype(e_dtype)                     # [TM, H]
    asrc_t = asrcT_ref[...].astype(e_dtype)                  # [H, TN]
    hxa = hxa_ref[...]                                       # [TN, H*(C+1)] bf16

    for h in range(heads):                                   # static unroll (H small)
        lo = h * cp1
        e = adst[:, h:h + 1] + asrc_t[h:h + 1, :]            # [TM, TN]
        e = jnp.where(e > 0, e, 0.2 * e)                     # LeakyReLU(0.2)
        e = e + mask_bias
        m_prev = m_scr[h]                                    # [TM, 1] f32
        m_new = jnp.maximum(m_prev,
                            jnp.max(e, axis=1, keepdims=True).astype(jnp.float32))
        scale = jnp.exp(m_prev - m_new)                      # [TM, 1] f32 (EUP)
        p = jnp.exp(e - m_new.astype(e_dtype))               # [TM, TN]
        # Denominator folded into the matmul via the per-head ones column.
        pm = jnp.dot(p.astype(jnp.bfloat16), hxa[:, lo:lo + cp1],
                     preferred_element_type=jnp.float32)     # [TM, C+1]
        acc_scr[h] = scale * acc_scr[h] + pm
        m_scr[h] = m_new

    @pl.when(j == pl.num_programs(1) - 1)
    def _finalize():
        bias = bias_ref[...]
        if output_log_softmax:
            parts = []
            for h in range(heads):
                num = acc_scr[h][:, :out_ch]
                den = acc_scr[h][:, out_ch:cp1]
                parts.append(num * pl.reciprocal(den, approx=False))  # exact on final layer
            full = parts[0] if heads == 1 else jnp.concatenate(parts, axis=1)
            full = full + bias
            mx = jnp.max(full, axis=1, keepdims=True)
            z = full - mx
            full = z - jnp.log(jnp.sum(jnp.exp(z), axis=1, keepdims=True))
            out_ref[...] = full.astype(out_ref.dtype)
        else:
            for h in range(heads):
                num = acc_scr[h][:, :out_ch]
                den = acc_scr[h][:, out_ch:cp1]
                res = (num * pl.reciprocal(den, approx=True)
                       + bias[:, h * out_ch:(h + 1) * out_ch])
                out_ref[:, h * out_ch:(h + 1) * out_ch] = res.astype(out_ref.dtype)


# ---------------------------------------------------------------------------
# Layer wrapper.
# ---------------------------------------------------------------------------
def gat_layer(x_aug, adj_i8, w_aug, bias, *, heads, out_ch, tm, tn,
              input_elu, output_log_softmax, out_dtype, e_dtype, vmem_limit):
    n, fin1 = x_aug.shape
    assert n % tm == 0 and n % tn == 0, (n, tm, tn)
    cp1 = out_ch + 1
    width_hxa = heads * cp1
    w_tot = width_hxa + 2 * heads
    assert w_aug.shape == (fin1, w_tot)

    hxa, adst, asrc = pl.pallas_call(
        functools.partial(_gat_project_kernel, input_elu=input_elu,
                          width_hxa=width_hxa, heads=heads),
        out_shape=(jax.ShapeDtypeStruct((n, width_hxa), jnp.bfloat16),
                   jax.ShapeDtypeStruct((n, heads), jnp.float32),
                   jax.ShapeDtypeStruct((n, heads), jnp.float32)),
        grid=(n // tm,),
        in_specs=[pl.BlockSpec((tm, fin1), lambda i: (i, 0)),
                  pl.BlockSpec((fin1, w_tot), lambda i: (0, 0))],
        out_specs=[pl.BlockSpec((tm, width_hxa), lambda i: (i, 0)),
                   pl.BlockSpec((tm, heads), lambda i: (i, 0)),
                   pl.BlockSpec((tm, heads), lambda i: (i, 0))],
        compiler_params=pltpu.CompilerParams(
            dimension_semantics=("parallel",), vmem_limit_bytes=vmem_limit),
    )(x_aug, w_aug)

    asrc_t = asrc.T                                          # [H, Np] (tiny)

    out = pl.pallas_call(
        functools.partial(_gat_attn_kernel, heads=heads, out_ch=out_ch,
                          e_dtype=e_dtype, output_log_softmax=output_log_softmax),
        out_shape=jax.ShapeDtypeStruct((n, heads * out_ch), out_dtype),
        grid=(n // tm, n // tn),
        in_specs=[pl.BlockSpec((tm, heads), lambda i, j: (i, 0)),        # alpha_dst
                  pl.BlockSpec((heads, tn), lambda i, j: (0, j)),        # alpha_src^T
                  pl.BlockSpec((tn, width_hxa), lambda i, j: (j, 0)),    # hx+ones (bf16)
                  pl.BlockSpec((tm, tn), lambda i, j: (i, j)),           # adj (int8)
                  pl.BlockSpec((1, heads * out_ch), lambda i, j: (0, 0))],  # bias
        out_specs=pl.BlockSpec((tm, heads * out_ch), lambda i, j: (i, 0)),
        scratch_shapes=[pltpu.VMEM((heads, tm, 1), jnp.float32),         # running max
                        pltpu.VMEM((heads, tm, cp1), jnp.float32)],      # acc (+denom col)
        compiler_params=pltpu.CompilerParams(
            dimension_semantics=("parallel", "arbitrary"),
            vmem_limit_bytes=vmem_limit),
    )(adst, asrc_t, hxa, adj_i8, bias)
    return out


def gat_forward(x, adj_i8, params, *, tm=None, tn=None):
    n = x.shape[0]
    gen = _tpu_generation()
    d_tm, d_tn = _choose_tiles(n, gen)
    tm = d_tm if tm is None else tm
    tn = d_tn if tn is None else tn
    np_ = _round_up(n, max(tm, tn))
    assert np_ % tm == 0 and np_ % tn == 0

    # v5e has no bf16 VALU/EUP -> keep the [TM,TN] elementwise/exp path in f32 there.
    e_dtype = jnp.bfloat16 if gen >= 6 else jnp.float32
    if gen >= 7:
        vmem_limit = 48 << 20       # 64 MiB physical on v7x; leave headroom
    elif gen in (5, 6):
        vmem_limit = 96 << 20       # 128 MiB physical; scoped default is only 16/32 MiB
    elif gen == 4:
        vmem_limit = 64 << 20
    else:
        vmem_limit = None

    # Pad nodes once for both layers; padded rows get a self-loop (benign, sliced
    # off at the end); padded source columns stay masked for real rows.
    pad = np_ - n
    x_p = jnp.pad(x, ((0, pad), (0, 0)))
    adj_p = jnp.pad(adj_i8, ((0, pad), (0, pad)))
    if pad:
        idx = jnp.arange(n, np_)
        adj_p = adj_p.at[idx, idx].set(1)

    hid, ncls = params["hidden"], params["num_classes"]
    ones = jnp.ones((np_, 1), jnp.bfloat16)

    # conv1: GATConv(F -> hidden, heads=8, concat=True)
    w_aug1 = _build_w_aug(params["w1"], params["asrc1"], params["adst1"]).astype(jnp.bfloat16)
    x_aug = jnp.concatenate([x_p.astype(jnp.bfloat16), ones], axis=1)
    h = gat_layer(x_aug, adj_p, w_aug1, params["b1"], heads=8, out_ch=hid,
                  tm=tm, tn=tn, input_elu=False, output_log_softmax=False,
                  out_dtype=jnp.bfloat16, e_dtype=e_dtype, vmem_limit=vmem_limit)

    # ELU fused into conv2's projection; dropout(p=0.6) is eval-mode identity.
    # conv2: GATConv(hidden*8 -> num_classes, heads=1) + log_softmax(dim=1).
    w_aug2 = _build_w_aug(params["w2"], params["asrc2"], params["adst2"]).astype(jnp.bfloat16)
    h_aug = jnp.concatenate([h, ones], axis=1)
    out = gat_layer(h_aug, adj_p, w_aug2, params["b2"], heads=1, out_ch=ncls,
                    tm=tm, tn=tn, input_elu=True, output_log_softmax=True,
                    out_dtype=jnp.float32, e_dtype=e_dtype, vmem_limit=vmem_limit)
    return out[:n]


# ---------------------------------------------------------------------------
# Pure-JAX reference (f32) for correctness checking.
# ---------------------------------------------------------------------------
def gat_reference(x, adj_f32, params):
    def layer(xin, w, a_s, a_d, b, heads, out_ch, input_elu, log_sm):
        if input_elu:
            xin = _elu(xin)
        n = xin.shape[0]
        hx = (xin @ w).reshape(n, heads, out_ch)
        a_src = jnp.einsum("nhc,hc->nh", hx, a_s)
        a_dst = jnp.einsum("nhc,hc->nh", hx, a_d)
        e = a_dst[:, None, :] + a_src[None, :, :]              # [i, j, h]
        e = jnp.where(e > 0, e, 0.2 * e)
        e = jnp.where(adj_f32[:, :, None] > 0, e, -1e30)
        att = jax.nn.softmax(e, axis=1)
        out = jnp.einsum("ijh,jhc->ihc", att, hx).reshape(n, heads * out_ch) + b
        return jax.nn.log_softmax(out, axis=1) if log_sm else out
    h = layer(x, params["w1"], params["asrc1"], params["adst1"], params["b1"],
              8, params["hidden"], False, False)
    return layer(h, params["w2"], params["asrc2"], params["adst2"], params["b2"],
                 1, params["num_classes"], True, True)


if __name__ == "__main__":
    N = 200           # deliberately NOT a multiple of the tiles (exercises padding)
    F = 16            # dataset.num_features
    C = 4             # dataset.num_classes
    HID = 8           # hidden_channels
    HEADS = 8

    key = jax.random.PRNGKey(0)
    ks = jax.random.split(key, 10)

    x = jax.random.normal(ks[0], (N, F), dtype=jnp.float32)

    # Small synthetic graph: bidirectional ring (edge_index analogue), int8 mask
    # with adj[i, j] = 1 iff edge j -> i, plus self-loops (GATConv default).
    src = jnp.concatenate([jnp.arange(N), jnp.arange(N)])
    dst = jnp.concatenate([(jnp.arange(N) + 1) % N, (jnp.arange(N) - 1) % N])
    adj = jnp.zeros((N, N), jnp.int8).at[dst, src].set(1)
    adj = adj.at[jnp.arange(N), jnp.arange(N)].set(1)

    params = {
        "hidden": HID,
        "num_classes": C,
        # conv1: lin [F, HEADS*HID], att_src/att_dst [HEADS, HID], bias [1, HEADS*HID]
        "w1":    0.2 * jax.random.normal(ks[1], (F, HEADS * HID), jnp.float32),
        "asrc1": 0.2 * jax.random.normal(ks[2], (HEADS, HID), jnp.float32),
        "adst1": 0.2 * jax.random.normal(ks[3], (HEADS, HID), jnp.float32),
        "b1":    0.1 * jax.random.normal(ks[4], (1, HEADS * HID), jnp.float32),
        # conv2: lin [HEADS*HID, C], att_src/att_dst [1, C], bias [1, C]
        "w2":    0.2 * jax.random.normal(ks[5], (HEADS * HID, C), jnp.float32),
        "asrc2": 0.2 * jax.random.normal(ks[6], (1, C), jnp.float32),
        "adst2": 0.2 * jax.random.normal(ks[7], (1, C), jnp.float32),
        "b2":    0.1 * jax.random.normal(ks[8], (1, C), jnp.float32),
    }

    # tm=64 / tn=128 -> padded N=256, projection grid (4,), attention grid (4, 2):
    # exercises row tiling (megacore), source-block online softmax, and padding.
    out = gat_forward(x, adj, params, tm=64, tn=128)
    out = jax.block_until_ready(out)
    ref = gat_reference(x, adj.astype(jnp.float32), params)

    assert out.shape == (N, C)
    assert bool(jnp.all(jnp.isfinite(out)))
    # rows of log_softmax should sum (in prob space) to ~1
    assert bool(jnp.allclose(jnp.sum(jnp.exp(out), axis=1), 1.0, atol=1e-4))
    # bf16 MXU / bf16 elementwise (v6e/v7x) vs f32 reference
    err = float(jnp.max(jnp.abs(out - ref)))
    assert err < 0.25, f"kernel vs reference max abs diff too large: {err}"
    print("KERNEL_OK")
</pallas_src>

<mosaic_0001>
module attributes {stable_mosaic.version = 11 : i64} {
  func.func @_gat_project_kernel(%arg0: i32, %arg1: memref<64x17xbf16, #tpu.memory_space<vmem>>, %arg2: memref<17x88xbf16, #tpu.memory_space<vmem>>, %arg3: memref<64x72xbf16, #tpu.memory_space<vmem>>, %arg4: memref<64x8xf32, #tpu.memory_space<vmem>>, %arg5: memref<64x8xf32, #tpu.memory_space<vmem>>) attributes {dimension_semantics = [#tpu.dimension_semantics<parallel>], iteration_bounds = array<i64: 4>, scalar_prefetch = 0 : i64, scratch_operands = 0 : i64, tpu.core_type = #tpu.core_type<tc>, window_params = [{transform_indices = @transform_0, window_bounds = array<i64: 64, 17>}, {pipeline_mode = #tpu.pipeline_mode<synchronous>, transform_indices = @transform_1, window_bounds = array<i64: 17, 88>}, {transform_indices = @transform_2, window_bounds = array<i64: 64, 72>}, {transform_indices = @transform_3, window_bounds = array<i64: 64, 8>}, {transform_indices = @transform_4, window_bounds = array<i64: 64, 8>}]} {
    %c0 = arith.constant 0 : index
    %c0_0 = arith.constant 0 : index
    %0 = vector.load %arg1[%c0, %c0_0] : memref<64x17xbf16, #tpu.memory_space<vmem>>, vector<64x17xbf16>
    %c0_1 = arith.constant 0 : index
    %c0_2 = arith.constant 0 : index
    %1 = vector.load %arg2[%c0_1, %c0_2] : memref<17x88xbf16, #tpu.memory_space<vmem>>, vector<17x88xbf16>
    %cst = arith.constant dense<0.000000e+00> : vector<64x88xf32>
    %2 = tpu.matmul %0, %1, %cst {dimension_numbers = #tpu.dot_dimension_numbers<[1], [0], [0], [1], [0, 0, 1, 1], [], []>} : vector<64x17xbf16>, vector<17x88xbf16>, vector<64x88xf32> -> vector<64x88xf32>
    %3 = vector.extract_strided_slice %2 {offsets = [0, 0], sizes = [64, 72], strides = [1, 1]} : vector<64x88xf32> to vector<64x72xf32>
    %4 = arith.truncf %3 : vector<64x72xf32> to vector<64x72xbf16>
    %c0_3 = arith.constant 0 : index
    %c0_4 = arith.constant 0 : index
    %5 = vector.load %arg3[%c0_3, %c0_4] : memref<64x72xbf16, #tpu.memory_space<vmem>>, vector<64x72xbf16>
    tpu.vector_store %arg3[%c0_3, %c0_4], %4 {strides = array<i32>} : memref<64x72xbf16, #tpu.memory_space<vmem>>, vector<64x72xbf16>,
    %6 = vector.extract_strided_slice %2 {offsets = [0, 72], sizes = [64, 8], strides = [1, 1]} : vector<64x88xf32> to vector<64x8xf32>
    %c0_5 = arith.constant 0 : index
    %c0_6 = arith.constant 0 : index
    %7 = vector.load %arg4[%c0_5, %c0_6] : memref<64x8xf32, #tpu.memory_space<vmem>>, vector<64x8xf32>
    tpu.vector_store %arg4[%c0_5, %c0_6], %6 {strides = array<i32>} : memref<64x8xf32, #tpu.memory_space<vmem>>, vector<64x8xf32>,
    %8 = vector.extract_strided_slice %2 {offsets = [0, 80], sizes = [64, 8], strides = [1, 1]} : vector<64x88xf32> to vector<64x8xf32>
    %c0_7 = arith.constant 0 : index
    %c0_8 = arith.constant 0 : index
    %9 = vector.load %arg5[%c0_7, %c0_8] : memref<64x8xf32, #tpu.memory_space<vmem>>, vector<64x8xf32>
    tpu.vector_store %arg5[%c0_7, %c0_8], %8 {strides = array<i32>} : memref<64x8xf32, #tpu.memory_space<vmem>>, vector<64x8xf32>,
    return
  }
  func.func @transform_0(%arg0: i32) -> (i32, i32) {
    %c0_i32 = arith.constant 0 : i32
    %c0_i32_0 = arith.constant 0 : i32
    return %arg0, %c0_i32 : i32, i32
  }
  func.func @transform_1(%arg0: i32) -> (i32, i32) {
    %c0_i32 = arith.constant 0 : i32
    %c0_i32_0 = arith.constant 0 : i32
    %c0_i32_1 = arith.constant 0 : i32
    return %c0_i32, %c0_i32_0 : i32, i32
  }
  func.func @transform_2(%arg0: i32) -> (i32, i32) {
    %c0_i32 = arith.constant 0 : i32
    %c0_i32_0 = arith.constant 0 : i32
    return %arg0, %c0_i32 : i32, i32
  }
  func.func @transform_3(%arg0: i32) -> (i32, i32) {
    %c0_i32 = arith.constant 0 : i32
    %c0_i32_0 = arith.constant 0 : i32
    return %arg0, %c0_i32 : i32, i32
  }
  func.func @transform_4(%arg0: i32) -> (i32, i32) {
    %c0_i32 = arith.constant 0 : i32
    %c0_i32_0 = arith.constant 0 : i32
    return %arg0, %c0_i32 : i32, i32
  }
}

</mosaic_0001>

<llo_original>
// kernel: tpu_custom_call.1
$region0: #{tpu_custom_call.1}
  #allocation0 [shape = 'u32[]', space=smem, size = 0x4, offset = 0x4, fixed_abs, tag = 'smem constant byte address 0x4 - core index']
  #allocation1 [shape = 'u32[144,128]{1,0:T(1,128)}', space=vmem, size = 0x12000, scoped, tag = 'internal scratch']
  %s0 = inlined_call_operand.vmem [shape: bf16[256,17], index: 0, kind: input, shape index: {}]
  %s1 = inlined_call_operand.vmem [shape: bf16[17,88], index: 1, kind: input, shape index: {}]
  %s2 = inlined_call_operand.vmem [shape: bf16[256,72], index: 2, kind: output, shape index: {0}]
  %s3 = inlined_call_operand.vmem [shape: f32[256,8], index: 3, kind: output, shape index: {1}]
  %s4 = inlined_call_operand.vmem [shape: f32[256,8], index: 4, kind: output, shape index: {2}]
  %5 = xla_tuple %s2, %s3, %s4
  %s6 = sld [smem:[#allocation0]]
  $region57: #{tpu_custom_call.1} parent=0
    _
  %s8 = ssub.s32 1, %s6
  %s9 = scalar_select 0, %s8, %s6
  loop: start=0, step=1, limit=6
  $region2: #{tpu_custom_call.1} parent=0 // loop_pre_header
    _
  $region3: #{tpu_custom_call.1} parent=0 // loop_header
    %s11 = sphi 0, %s15
    %p12 = scmp.ge.s32.totalorder %s11, 6
    %s21 = sphi 0, %s23
    %s24 = sphi 0, %s21
    %s25 = sphi 0, %s24
    %s41 = sphi 0, %s25
    %s45 = sphi 0, %s45
    %s47 = sphi 0, %s45
    %s48 = sphi 0, %s47
    %s62 = sphi 0, %s48
    %s68 = sphi 0, %s70
    %s71 = sphi 0, %s68
    %s72 = sphi 0, %s71
    %s88 = sphi 0, %s72
    %s94 = sphi 0, %s96
    %s97 = sphi 0, %s94
    %s98 = sphi 0, %s97
    %s114 = sphi 0, %s98
    %s120 = sphi 0, %s122
    %s123 = sphi 0, %s120
    %s124 = sphi 0, %s123
    %s140 = sphi 0, %s124
  $region4: #{tpu_custom_call.1} parent=0 // loop_header_branch
    %14 = sbr.rel (%p12) target = $region8
  $region5: #{tpu_custom_call.1} parent=0 // loop_body
    %s16 = ssub.s32 %s11, 1
    %s17 = ssub.s32 %s11, 2
    %s18 = sadd.s32 %s11, 1
    %s19 = ssub.s32 %s11, %s18
    %p20 = scmp.eq.s32.totalorder %s19, 0
    %s22 = sadd.s32 %s21, 1
    %s23 = scalar_select %p20, %s21, %s22
    %p26 = pneg %p20
    %p27 = scmp.eq.s32.totalorder %s11, 3
    %p28 = por %p26, %p27
    %p29 = scmp.ne.s32.totalorder %s21, %s24
    %p30 = scmp.eq.s32.totalorder %s11, 0
    %p31 = por %p29, %p30
    %p32 = scmp.ne.s32.totalorder %s21, %s24
    %p33 = scmp.eq.s32.totalorder %s16, 3
    %p34 = por %p32, %p33
    %p35 = scmp.ne.s32.totalorder %s24, %s25
    %p36 = scmp.eq.s32.totalorder %s16, 0
    %p37 = por %p35, %p36
    %p38 = scmp.ne.s32.totalorder %s24, %s25
    %p39 = scmp.eq.s32.totalorder %s17, 3
    %p40 = por %p38, %p39
    %p42 = scmp.ne.s32.totalorder %s25, %s41
    %p43 = scmp.eq.s32.totalorder %s17, 0
    %p44 = por %p42, %p43
    %s46 = sadd.s32 %s45, 1
    %p49 = scmp.eq.s32.totalorder %s11, 3
    %p50 = scmp.ne.s32.totalorder %s45, %s47
    %p51 = scmp.eq.s32.totalorder %s11, 0
    %p52 = por %p50, %p51
    %p53 = scmp.ne.s32.totalorder %s45, %s47
    %p54 = scmp.eq.s32.totalorder %s16, 3
    %p55 = por %p53, %p54
    %p56 = scmp.ne.s32.totalorder %s47, %s48
    %p57 = scmp.eq.s32.totalorder %s16, 0
    %p58 = por %p56, %p57
    %p59 = scmp.ne.s32.totalorder %s47, %s48
    %p60 = scmp.eq.s32.totalorder %s17, 3
    %p61 = por %p59, %p60
    %p63 = scmp.ne.s32.totalorder %s48, %s62
    %p64 = scmp.eq.s32.totalorder %s17, 0
    %p65 = por %p63, %p64
    %s66 = ssub.s32 %s11, %s18
    %p67 = scmp.eq.s32.totalorder %s66, 0
    %s69 = sadd.s32 %s68, 1
    %s70 = scalar_select %p67, %s68, %s69
    %p73 = pneg %p67
    %p74 = scmp.eq.s32.totalorder %s11, 3
    %p75 = por %p73, %p74
    %p76 = scmp.ne.s32.totalorder %s68, %s71
    %p77 = scmp.eq.s32.totalorder %s11, 0
    %p78 = por %p76, %p77
    %p79 = scmp.ne.s32.totalorder %s68, %s71
    %p80 = scmp.eq.s32.totalorder %s16, 3
    %p81 = por %p79, %p80
    %p82 = scmp.ne.s32.totalorder %s71, %s72
    %p83 = scmp.eq.s32.totalorder %s16, 0
    %p84 = por %p82, %p83
    %p85 = scmp.ne.s32.totalorder %s71, %s72
    %p86 = scmp.eq.s32.totalorder %s17, 3
    %p87 = por %p85, %p86
    %p89 = scmp.ne.s32.totalorder %s72, %s88
    %p90 = scmp.eq.s32.totalorder %s17, 0
    %p91 = por %p89, %p90
    %s92 = ssub.s32 %s11, %s18
    %p93 = scmp.eq.s32.totalorder %s92, 0
    %s95 = sadd.s32 %s94, 1
    %s96 = scalar_select %p93, %s94, %s95
    %p99 = pneg %p93
    %p100 = scmp.eq.s32.totalorder %s11, 3
    %p101 = por %p99, %p100
    %p102 = scmp.ne.s32.totalorder %s94, %s97
    %p103 = scmp.eq.s32.totalorder %s11, 0
    %p104 = por %p102, %p103
    %p105 = scmp.ne.s32.totalorder %s94, %s97
    %p106 = scmp.eq.s32.totalorder %s16, 3
    %p107 = por %p105, %p106
    %p108 = scmp.ne.s32.totalorder %s97, %s98
    %p109 = scmp.eq.s32.totalorder %s16, 0
    %p110 = por %p108, %p109
    %p111 = scmp.ne.s32.totalorder %s97, %s98
    %p112 = scmp.eq.s32.totalorder %s17, 3
    %p113 = por %p111, %p112
    %p115 = scmp.ne.s32.totalorder %s98, %s114
    %p116 = scmp.eq.s32.totalorder %s17, 0
    %p117 = por %p115, %p116
    %s118 = ssub.s32 %s11, %s18
    %p119 = scmp.eq.s32.totalorder %s118, 0
    %s121 = sadd.s32 %s120, 1
    %s122 = scalar_select %p119, %s120, %s121
    %p125 = pneg %p119
    %p126 = scmp.eq.s32.totalorder %s11, 3
    %p127 = por %p125, %p126
    %p128 = scmp.ne.s32.totalorder %s120, %s123
    %p129 = scmp.eq.s32.totalorder %s11, 0
    %p130 = por %p128, %p129
    %p131 = scmp.ne.s32.totalorder %s120, %s123
    %p132 = scmp.eq.s32.totalorder %s16, 3
    %p133 = por %p131, %p132
    %p134 = scmp.ne.s32.totalorder %s123, %s124
    %p135 = scmp.eq.s32.totalorder %s16, 0
    %p136 = por %p134, %p135
    %p137 = scmp.ne.s32.totalorder %s123, %s124
    %p138 = scmp.eq.s32.totalorder %s17, 3
    %p139 = por %p137, %p138
    %p141 = scmp.ne.s32.totalorder %s124, %s140
    %p142 = scmp.eq.s32.totalorder %s17, 0
    %p143 = por %p141, %p142
    %p144 = scmp.le.s32.totalorder 1, %s11
    %p145 = scmp.lt.s32.totalorder %s11, 5
    %p146 = pnand %p144, %p145
    %p147 = pneg %p146
    // Predicated region
    $region9: #{tpu_custom_call.1} parent=5 // pred_check
      _
    $region10: #{tpu_custom_call.1} parent=5 // pred_check_branch
      %149 = sbr.rel (%p146) target = $region12
    $region11: #{tpu_custom_call.1} parent=5 // pred_region
      %s150 = ssub.s32 %s11, 1
      // Predicated region
      $region13: #{tpu_custom_call.1} parent=11 // pred_check
        %p151 = pneg %p58
      $region14: #{tpu_custom_call.1} parent=11 // pred_check_branch
        %153 = sbr.rel (%p151) target = $region16
      $region15: #{tpu_custom_call.1} parent=11 // pred_region
        _
      $region16: #{tpu_custom_call.1} parent=11 // pred_fallthru
        _
    $region12: #{tpu_custom_call.1} parent=5 // pred_fallthru
      _
    %p154 = scmp.lt.s32.totalorder %s11, 4
    // Predicated region
    $region17: #{tpu_custom_call.1} parent=5 // pred_check
      %p155 = pneg %p154
    $region18: #{tpu_custom_call.1} parent=5 // pred_check_branch
      %157 = sbr.rel (%p155) target = $region20
    $region19: #{tpu_custom_call.1} parent=5 // pred_region
      // Predicated region
      $region21: #{tpu_custom_call.1} parent=19 // pred_check
        %p158 = pneg %p31
      $region22: #{tpu_custom_call.1} parent=19 // pred_check_branch
        %160 = sbr.rel (%p158) target = $region24
      $region23: #{tpu_custom_call.1} parent=19 // pred_region
        %s161 = smul.u32 8, %s11
        %p162 = scmp.lt.s32.totalorder %s161, 31
        %s163 = scalar_select %p162, %s161, 31
        %s164 = smul.addr %s163, 4
        %s165 = scalar_lea.vmem %s0, %s164
        %s166 = smul.u32 8, %s11
      $region24: #{tpu_custom_call.1} parent=19 // pred_fallthru
        _
    $region20: #{tpu_custom_call.1} parent=5 // pred_fallthru
      _
    %p167 = scmp.le.s32.totalorder 1, %s11
    %p168 = scmp.lt.s32.totalorder %s11, 5
    %p169 = pnand %p167, %p168
    %p170 = pneg %p169
    // Predicated region
    $region25: #{tpu_custom_call.1} parent=5 // pred_check
      _
    $region26: #{tpu_custom_call.1} parent=5 // pred_check_branch
      %172 = sbr.rel (%p169) target = $region28
    $region27: #{tpu_custom_call.1} parent=5 // pred_region
      %s173 = ssub.s32 %s11, 1
      %s174 = smul.u32 8, %s16
      %p175 = scmp.lt.s32.totalorder %s174, 31
      %s176 = scalar_select %p175, %s174, 31
      %s177 = smul.addr %s176, 4
      %s178 = scalar_lea.vmem %s0, %s177
      %p179 = pneg %p37
      %p180 = pneg %p34
      %p181 = pneg %p58
      %p182 = pneg %p55
      %p183 = pneg %p84
      %p184 = pneg %p81
      %s185 = smul.u32 8, %s16
      %p186 = scmp.lt.s32.totalorder %s185, 31
      %s187 = scalar_select %p186, %s185, 31
      %s188 = smul.addr %s187, 4
      %s189 = scalar_lea.vmem %s2, %s188
      %p190 = pneg %p110
      %p191 = pneg %p107
      %s192 = smul.u32 8, %s16
      %p193 = scmp.lt.s32.totalorder %s192, 31
      %s194 = scalar_select %p193, %s192, 31
      %s195 = smul.addr %s194, 8
      %s196 = scalar_lea.vmem %s3, %s195
      %p197 = pneg %p136
      %p198 = pneg %p133
      %s199 = smul.u32 8, %s16
      %p200 = scmp.lt.s32.totalorder %s199, 31
      %s201 = scalar_select %p200, %s199, 31
      %s202 = smul.addr %s201, 8
      %s203 = scalar_lea.vmem %s4, %s202
      %s204 = smul.u32 8, %s16
      %p205 = scmp.lt.s32.totalorder %s204, 31
      %s206 = scalar_select %p205, %s204, 31
      %s207 = smul.addr %s206, 4
      %s208 = scalar_lea.vmem %s0, %s207
      %s209 = smul.u32 8, %s16
      %s210 = smul.u32 8, %s16
      %p211 = scmp.lt.s32.totalorder %s210, 31
      %s212 = scalar_select %p211, %s210, 31
      %s213 = smul.addr %s212, 4
      %s214 = scalar_lea.vmem %s2, %s213
      %s215 = smul.u32 8, %s16
      %s216 = smul.u32 8, %s16
      %p217 = scmp.lt.s32.totalorder %s216, 31
      %s218 = scalar_select %p217, %s216, 31
      %s219 = smul.addr %s218, 8
      %s220 = scalar_lea.vmem %s3, %s219
      %s221 = smul.u32 8, %s16
      %s222 = smul.u32 8, %s16
      %p223 = scmp.lt.s32.totalorder %s222, 31
      %s224 = scalar_select %p223, %s222, 31
      %s225 = smul.addr %s224, 8
      %s226 = scalar_lea.vmem %s4, %s225
      %s227 = smul.u32 8, %s16
      %v229 = vld [vmem:[%s208] sm:$0xf]
      %v230 = vld [vmem:[%s208 + $0x4] sm:$0xf]
      %v231 = vld [vmem:[%s208 + $0x8] sm:$0xf]
      %v232 = vld [vmem:[%s208 + $0xc] sm:$0xf]
      %v233 = vld [vmem:[%s208 + $0x10] sm:$0xf]
      %v234 = vld [vmem:[%s208 + $0x14] sm:$0xf]
      %v235 = vld [vmem:[%s208 + $0x18] sm:$0xf]
      %v236 = vld [vmem:[%s208 + $0x1c] sm:$0xf]
      %v237 = vld [vmem:[%s1] sm:$0xf]
      %v238 = vld [vmem:[%s1 + $0x4] sm:$0xf]
      %v239 = vld [vmem:[%s1 + $0x8] sm:$0x1]
      %v248 = vunpack.c.l.b16 %v229
      %v249 = vunpack.c.l.b16 %v230
      %v250 = vunpack.c.l.b16 %v231
      %v251 = vunpack.c.l.b16 %v232
      %v252 = vunpack.c.l.b16 %v233
      %v253 = vunpack.c.l.b16 %v234
      %v254 = vunpack.c.l.b16 %v235
      %v255 = vunpack.c.l.b16 %v236
      %v256 = vpack.c.b16 %v249, %v248
      %v257 = vpack.c.b16 %v251, %v250
      %v258 = vpack.c.b16 %v253, %v252
      %v259 = vpack.c.b16 %v255, %v254
      %v263 = vunpack.c.l.b16 %v237
      %v264 = vunpack.c.l.b16 %v238
      %v265 = vunpack.c.l.b16 %v239
      %v266 = vpack.c.b16 %v264, %v263
      %v267 = vpack.c.b16 %v265, %v265
      %vm269 = vcmask 138240
      %v271 = vsel %vm269, %v256, 0
      %v274 = vsel %vm269, %v257, 0
      %v277 = vsel %vm269, %v258, 0
      %v280 = vsel %vm269, %v259, 0
      %vm282 = vcmask 1040384
      %v283 = vsel 0, 4294967295, 65535
      %v284 = vsel %vm282, %v283, 0
      %v286 = vand.u32 %v267, %v284
      %288 = vmatprep.subr.bf16.mxu0 0
      %289 = vmatpush1.bf16.msra.mxu0 0
      %290 = vmatprep.subr.bf16.mxu0 0
      %291 = vmatpush1.bf16.msra.mxu0 0
      %292 = vmatprep.subr.bf16.mxu0 0
      %293 = vmatpush1.bf16.msra.mxu0 0
      %294 = vmatprep.subr.bf16.mxu0 0
      %295 = vmatpush1.bf16.msra.mxu0 0
      %296 = vmatprep.subr.bf16.mxu0 0
      %297 = vmatpush1.bf16.msra.mxu0 0
      %298 = vmatprep.subr.bf16.mxu0 0
      %299 = vmatpush1.bf16.msra.mxu0 0
      %300 = vmatprep.subr.bf16.mxu0 0
      %301 = vmatpush1.bf16.msra.mxu0 %v286
      %302 = vmatprep.subr.bf16.mxu0 0
      %303 = vmatpush1.bf16.msra.mxu0 %v266
      %304 = vmatprep.subr.bf16.mxu0 0
      %305 = vmatpush2.bf16.msra.mxu0 0
      %306 = vmatprep.subr.bf16.mxu0 0
      %307 = vmatpush2.bf16.msra.mxu0 0
      %308 = vmatprep.subr.bf16.mxu0 0
      %309 = vmatpush2.bf16.msra.mxu0 0
      %310 = vmatprep.subr.bf16.mxu0 0
      %311 = vmatpush2.bf16.msra.mxu0 0
      %312 = vmatprep.subr.bf16.mxu0 0
      %313 = vmatpush2.bf16.msra.mxu0 0
      %314 = vmatprep.subr.bf16.mxu0 0
      %315 = vmatpush2.bf16.msra.mxu0 0
      %316 = vmatprep.subr.bf16.mxu0 0
      %317 = vmatpush2.bf16.msra.mxu0 0
      %318 = vmatprep.subr.bf16.mxu0 0
      %319 = vmatpush2.bf16.msra.mxu0 0
      %320 = vmatprep.mubr.bf16.mxu0 0
      %321 = vmatmul.mubr.bf16.gmra.mxu0 %v271
      %v322 = vpop.f32.mrf.mxu0
      %v323 = vadd.f32 0.0, %v322
      %v324 = vpop.f32.mrf.mxu0
      %v325 = vpop.f32.mrf.mxu0
      %v326 = vadd.f32 0.0, %v325
      %v327 = vpop.f32.mrf.mxu0
      %328 = vmatprep.mubr.bf16.mxu0 0
      %329 = vmatmul.mubr.bf16.gmra.mxu0 %v274
      %v330 = vpop.f32.mrf.mxu0
      %v331 = vadd.f32 0.0, %v330
      %v332 = vpop.f32.mrf.mxu0
      %v333 = vpop.f32.mrf.mxu0
      %v334 = vadd.f32 0.0, %v333
      %v335 = vpop.f32.mrf.mxu0
      %336 = vmatprep.mubr.bf16.mxu0 0
      %337 = vmatmul.mubr.bf16.gmra.mxu0 %v277
      %v338 = vpop.f32.mrf.mxu0
      %v339 = vadd.f32 0.0, %v338
      %v340 = vpop.f32.mrf.mxu0
      %v341 = vpop.f32.mrf.mxu0
      %v342 = vadd.f32 0.0, %v341
      %v343 = vpop.f32.mrf.mxu0
      %344 = vmatprep.mubr.bf16.mxu0 0
      %345 = vmatmul.mubr.bf16.gmra.mxu0 %v280
      %v346 = vpop.f32.mrf.mxu0
      %v347 = vadd.f32 0.0, %v346
      %v348 = vpop.f32.mrf.mxu0
      %v349 = vpop.f32.mrf.mxu0
      %v350 = vadd.f32 0.0, %v349
      %v351 = vpop.f32.mrf.mxu0
      %352 = vdwg.mxu0
      %v353 = vpack.c.bf16 %v326, %v323
      %v354 = vpack.c.bf16 %v334, %v331
      %v355 = vpack.c.bf16 %v342, %v339
      %v356 = vpack.c.bf16 %v350, %v347
      %v361 = vunpack.c.l.b16 %v353
      %v362 = vunpack.c.h.b16 %v353
      %v363 = vunpack.c.l.b16 %v354
      %v364 = vunpack.c.h.b16 %v354
      %v365 = vunpack.c.l.b16 %v355
      %v366 = vunpack.c.h.b16 %v355
      %v367 = vunpack.c.l.b16 %v356
      %v368 = vunpack.c.h.b16 %v356
      %v369 = vpack.c.b16 %v361, %v361
      %v370 = vpack.c.b16 %v362, %v362
      %v371 = vpack.c.b16 %v363, %v363
      %v372 = vpack.c.b16 %v364, %v364
      %v373 = vpack.c.b16 %v365, %v365
      %v374 = vpack.c.b16 %v366, %v366
      %v375 = vpack.c.b16 %v367, %v367
      %v376 = vpack.c.b16 %v368, %v368
      %vm385 = vcmask 584704
      %386 = vst.msk [vmem:[%s214] sm:$0xf] %vm385, %v369
      %387 = vst.msk [vmem:[%s214 + $0x4] sm:$0xf] %vm385, %v370
      %388 = vst.msk [vmem:[%s214 + $0x8] sm:$0xf] %vm385, %v371
      %389 = vst.msk [vmem:[%s214 + $0xc] sm:$0xf] %vm385, %v372
      %390 = vst.msk [vmem:[%s214 + $0x10] sm:$0xf] %vm385, %v373
      %391 = vst.msk [vmem:[%s214 + $0x14] sm:$0xf] %vm385, %v374
      %392 = vst.msk [vmem:[%s214 + $0x18] sm:$0xf] %vm385, %v375
      %393 = vst.msk [vmem:[%s214 + $0x1c] sm:$0xf] %vm385, %v376
      %402 = vrot.lane.b32.xlu0 %v323, 56
      %v403 = vpop.permute.xlu0 %402
      %404 = vrot.lane.b32.xlu0 %v326, 56
      %v405 = vpop.permute.xlu0 %404
      %406 = vrot.lane.b32.xlu0 %v331, 56
      %v407 = vpop.permute.xlu0 %406
      %408 = vrot.lane.b32.xlu0 %v334, 56
      %v409 = vpop.permute.xlu0 %408
      %410 = vrot.lane.b32.xlu0 %v339, 56
      %v411 = vpop.permute.xlu0 %410
      %412 = vrot.lane.b32.xlu0 %v342, 56
      %v413 = vpop.permute.xlu0 %412
      %414 = vrot.lane.b32.xlu0 %v347, 56
      %v415 = vpop.permute.xlu0 %414
      %416 = vrot.lane.b32.xlu0 %v350, 56
      %v417 = vpop.permute.xlu0 %416
      %vm426 = vcmask 64512
      %427 = vst.msk [vmem:[%s220] sm:$0xff] %vm426, %v403
      %428 = vst.msk [vmem:[%s220 + $0x8] sm:$0xff] %vm426, %v405
      %429 = vst.msk [vmem:[%s220 + $0x10] sm:$0xff] %vm426, %v407
      %430 = vst.msk [vmem:[%s220 + $0x18] sm:$0xff] %vm426, %v409
      %431 = vst.msk [vmem:[%s220 + $0x20] sm:$0xff] %vm426, %v411
      %432 = vst.msk [vmem:[%s220 + $0x28] sm:$0xff] %vm426, %v413
      %433 = vst.msk [vmem:[%s220 + $0x30] sm:$0xff] %vm426, %v415
      %434 = vst.msk [vmem:[%s220 + $0x38] sm:$0xff] %vm426, %v417
      %435 = vrot.lane.b32.xlu0 %v323, 48
      %v436 = vpop.permute.xlu0 %435
      %437 = vrot.lane.b32.xlu0 %v326, 48
      %v438 = vpop.permute.xlu0 %437
      %439 = vrot.lane.b32.xlu0 %v331, 48
      %v440 = vpop.permute.xlu0 %439
      %441 = vrot.lane.b32.xlu0 %v334, 48
      %v442 = vpop.permute.xlu0 %441
      %443 = vrot.lane.b32.xlu0 %v339, 48
      %v444 = vpop.permute.xlu0 %443
      %445 = vrot.lane.b32.xlu0 %v342, 48
      %v446 = vpop.permute.xlu0 %445
      %447 = vrot.lane.b32.xlu0 %v347, 48
      %v448 = vpop.permute.xlu0 %447
      %449 = vrot.lane.b32.xlu0 %v350, 48
      %v450 = vpop.permute.xlu0 %449
      %459 = vst.msk [vmem:[%s226] sm:$0xff] %vm426, %v436
      %460 = vst.msk [vmem:[%s226 + $0x8] sm:$0xff] %vm426, %v438
      %461 = vst.msk [vmem:[%s226 + $0x10] sm:$0xff] %vm426, %v440
      %462 = vst.msk [vmem:[%s226 + $0x18] sm:$0xff] %vm426, %v442
      %463 = vst.msk [vmem:[%s226 + $0x20] sm:$0xff] %vm426, %v444
      %464 = vst.msk [vmem:[%s226 + $0x28] sm:$0xff] %vm426, %v446
      %465 = vst.msk [vmem:[%s226 + $0x30] sm:$0xff] %vm426, %v448
      %466 = vst.msk [vmem:[%s226 + $0x38] sm:$0xff] %vm426, %v450
      %s467 = smul.u32 8, %s16
      %p468 = scmp.lt.s32.totalorder %s467, 31
      %s469 = scalar_select %p468, %s467, 31
      %s470 = smul.addr %s469, 4
      %s471 = scalar_lea.vmem %s2, %s470
      %s472 = smul.u32 8, %s16
      %p473 = scmp.lt.s32.totalorder %s472, 31
      %s474 = scalar_select %p473, %s472, 31
      %s475 = smul.addr %s474, 8
      %s476 = scalar_lea.vmem %s3, %s475
      %s477 = smul.u32 8, %s16
      %p478 = scmp.lt.s32.totalorder %s477, 31
      %s479 = scalar_select %p478, %s477, 31
      %s480 = smul.addr %s479, 8
      %s481 = scalar_lea.vmem %s4, %s480
      // Predicated region
      $region29: #{tpu_custom_call.1} parent=27 // pred_check
        %p482 = pneg %p81
      $region30: #{tpu_custom_call.1} parent=27 // pred_check_branch
        %484 = sbr.rel (%p482) target = $region32
      $region31: #{tpu_custom_call.1} parent=27 // pred_region
        %s485 = smul.u32 8, %s16
      $region32: #{tpu_custom_call.1} parent=27 // pred_fallthru
        _
      // Predicated region
      $region33: #{tpu_custom_call.1} parent=27 // pred_check
        %p486 = pneg %p107
      $region34: #{tpu_custom_call.1} parent=27 // pred_check_branch
        %488 = sbr.rel (%p486) target = $region36
      $region35: #{tpu_custom_call.1} parent=27 // pred_region
        %s489 = smul.u32 8, %s16
      $region36: #{tpu_custom_call.1} parent=27 // pred_fallthru
        _
      // Predicated region
      $region37: #{tpu_custom_call.1} parent=27 // pred_check
        %p490 = pneg %p133
      $region38: #{tpu_custom_call.1} parent=27 // pred_check_branch
        %492 = sbr.rel (%p490) target = $region40
      $region39: #{tpu_custom_call.1} parent=27 // pred_region
        %s493 = smul.u32 8, %s16
      $region40: #{tpu_custom_call.1} parent=27 // pred_fallthru
        _
    $region28: #{tpu_custom_call.1} parent=5 // pred_fallthru
      _
    %p494 = scmp.le.s32.totalorder 2, %s11
    // Predicated region
    $region41: #{tpu_custom_call.1} parent=5 // pred_check
      %p495 = pneg %p494
    $region42: #{tpu_custom_call.1} parent=5 // pred_check_branch
      %497 = sbr.rel (%p495) target = $region44
    $region43: #{tpu_custom_call.1} parent=5 // pred_region
      %s498 = ssub.s32 %s11, 2
      // Predicated region
      $region45: #{tpu_custom_call.1} parent=43 // pred_check
        %p499 = pneg %p87
      $region46: #{tpu_custom_call.1} parent=43 // pred_check_branch
        %501 = sbr.rel (%p499) target = $region48
      $region47: #{tpu_custom_call.1} parent=43 // pred_region
        %s502 = smul.u32 8, %s17
        %p503 = scmp.lt.s32.totalorder %s502, 31
        %s504 = scalar_select %p503, %s502, 31
        %s505 = smul.addr %s504, 4
        %s506 = scalar_lea.vmem %s2, %s505
      $region48: #{tpu_custom_call.1} parent=43 // pred_fallthru
        _
      // Predicated region
      $region49: #{tpu_custom_call.1} parent=43 // pred_check
        %p507 = pneg %p113
      $region50: #{tpu_custom_call.1} parent=43 // pred_check_branch
        %509 = sbr.rel (%p507) target = $region52
      $region51: #{tpu_custom_call.1} parent=43 // pred_region
        %s510 = smul.u32 8, %s17
        %p511 = scmp.lt.s32.totalorder %s510, 31
        %s512 = scalar_select %p511, %s510, 31
        %s513 = smul.addr %s512, 8
        %s514 = scalar_lea.vmem %s3, %s513
      $region52: #{tpu_custom_call.1} parent=43 // pred_fallthru
        _
      // Predicated region
      $region53: #{tpu_custom_call.1} parent=43 // pred_check
        %p515 = pneg %p139
      $region54: #{tpu_custom_call.1} parent=43 // pred_check_branch
        %517 = sbr.rel (%p515) target = $region56
      $region55: #{tpu_custom_call.1} parent=43 // pred_region
        %s518 = smul.u32 8, %s17
        %p519 = scmp.lt.s32.totalorder %s518, 31
        %s520 = scalar_select %p519, %s518, 31
        %s521 = smul.addr %s520, 8
        %s522 = scalar_lea.vmem %s4, %s521
      $region56: #{tpu_custom_call.1} parent=43 // pred_fallthru
        _
    $region44: #{tpu_custom_call.1} parent=5 // pred_fallthru
      _
  $region6: #{tpu_custom_call.1} parent=0 // loop_footer
    %s15 = sadd.s32 1, %s11
  $region7: #{tpu_custom_call.1} parent=0 // loop_footer_branch
    %10 = sbr.rel target = $region3
  $region8: #{tpu_custom_call.1} parent=0 // loop_exit
    _

</llo_original>
